<compile_context>
chip_gen: v6e
topology: v6e:2x2x1
jax: 0.10.0
libtpu: 0.0.40
codegen_flags: <defaults>
</compile_context>

<pallas_src>
import jax
import jax.numpy as jnp
from jax import lax
from jax.experimental import pallas as pl
from jax.experimental.pallas import tpu as pltpu


def _round_up(x, m):
    return ((x + m - 1) // m) * m


# ---------------------------------------------------------------------------
# Kernel 1: Y = x @ W + b   (projection, tiled over row-tiles of x)
# ---------------------------------------------------------------------------
def _xw_bias_kernel(x_ref, w_ref, b_ref, y_ref):
    xw = jnp.dot(x_ref[...], w_ref[...], preferred_element_type=jnp.float32)
    y_ref[...] = (xw + b_ref[...]).astype(y_ref.dtype)


# ---------------------------------------------------------------------------
# Kernel 2: out = G @ Y     (tiled over (row tiles, K tiles), f32 accumulator)
# ---------------------------------------------------------------------------
def _g_matmul_kernel(g_ref, y_ref, o_ref, acc_ref):
    @pl.when(pl.program_id(1) == 0)
    def _():
        acc_ref[...] = jnp.zeros_like(acc_ref)

    acc_ref[...] += jnp.dot(g_ref[...], y_ref[...],
                            preferred_element_type=jnp.float32)

    @pl.when(pl.program_id(1) == pl.num_programs(1) - 1)
    def _():
        o_ref[...] = acc_ref[...].astype(o_ref.dtype)


def hgnn_conv(x, weight, bias, G, *, tm=256, tk=256, compute_dtype=None):
    """out = G @ (x @ weight + bias), matching HGNN_conv.forward."""
    N, in_ft = x.shape
    out_ft = weight.shape[1]
    out_dtype = x.dtype
    if compute_dtype is None:
        compute_dtype = x.dtype

    # Lane-dense output: pad out_ft up to a multiple of 128.
    out_p = _round_up(max(out_ft, 128), 128)
    # Pad node dims up to the tile sizes (zero pad => exact result).
    n_rows = _round_up(N, tm)   # rows of G / out
    n_k = _round_up(N, tk)      # reduction dim (cols of G, rows of Y)

    w_p = jnp.zeros((in_ft, out_p), x.dtype).at[:, :out_ft].set(weight)
    if bias is None:
        b_p = jnp.zeros((1, out_p), x.dtype)
    else:
        b_p = jnp.zeros((1, out_p), x.dtype).at[0, :out_ft].set(bias)
    x_p = jnp.zeros((n_k, in_ft), x.dtype).at[:N, :].set(x)
    g_p = jnp.zeros((n_rows, n_k), x.dtype).at[:N, :N].set(G)

    # ---------------------- Y = x @ W + b  (Pallas) -------------------------
    y = pl.pallas_call(
        _xw_bias_kernel,
        out_shape=jax.ShapeDtypeStruct((n_k, out_p), compute_dtype),
        grid_spec=pltpu.PrefetchScalarGridSpec(
            num_scalar_prefetch=0,
            grid=(n_k // tk,),
            in_specs=[
                pl.BlockSpec((tk, in_ft), lambda i: (i, 0)),
                pl.BlockSpec((in_ft, out_p), lambda i: (0, 0)),
                pl.BlockSpec((1, out_p), lambda i: (0, 0)),
            ],
            out_specs=pl.BlockSpec((tk, out_p), lambda i: (i, 0)),
        ),
        compiler_params=pltpu.CompilerParams(
            dimension_semantics=("parallel",)),
    )(x_p, w_p, b_p)

    # Optionally stream G in a narrower dtype (bf16) to halve HBM traffic.
    g_c = g_p.astype(compute_dtype)

    # ---------------------- out = G @ Y  (Pallas, tiled) --------------------
    out_padded = pl.pallas_call(
        _g_matmul_kernel,
        out_shape=jax.ShapeDtypeStruct((n_rows, out_p), out_dtype),
        grid_spec=pltpu.PrefetchScalarGridSpec(
            num_scalar_prefetch=0,
            grid=(n_rows // tm, n_k // tk),
            in_specs=[
                pl.BlockSpec((tm, tk), lambda i, k: (i, k)),
                pl.BlockSpec((tk, out_p), lambda i, k: (k, 0)),
            ],
            out_specs=pl.BlockSpec((tm, out_p), lambda i, k: (i, 0)),
            scratch_shapes=[pltpu.VMEM((tm, out_p), jnp.float32)],
        ),
        compiler_params=pltpu.CompilerParams(
            dimension_semantics=("parallel", "arbitrary")),
    )(g_c, y)

    return out_padded[:N, :out_ft]


if __name__ == "__main__":
    # Small-but-multi-tile shapes: N=512 nodes, in_ft=64, out_ft=96.
    # With tm=tk=256 the main kernel runs a (2, 2) grid, exercising the
    # pipelined G stream and the pl.when accumulator path.
    N, in_ft, out_ft = 512, 64, 96
    dtype = jnp.float32

    key = jax.random.PRNGKey(0)
    kx, kg, kw, kb = jax.random.split(key, 4)

    # Deterministic parameter init mirroring reset_parameters():
    # uniform(-stdv, stdv) with stdv = 1/sqrt(out_ft).
    stdv = 1.0 / (out_ft ** 0.5)
    weight = jax.random.uniform(kw, (in_ft, out_ft), dtype, -stdv, stdv)
    bias = jax.random.uniform(kb, (out_ft,), dtype, -stdv, stdv)

    x = jax.random.normal(kx, (N, in_ft), dtype)
    G = jax.random.normal(kg, (N, N), dtype)

    # Pure-JAX reference of the forward semantics.
    ref = jnp.dot(
        G,
        jnp.dot(x, weight, precision=lax.Precision.HIGHEST) + bias,
        precision=lax.Precision.HIGHEST,
    )

    # f32 path: exact module semantics.
    out = jax.block_until_ready(hgnn_conv(x, weight, bias, G, tm=256, tk=256))
    assert out.shape == (N, out_ft)
    assert jnp.allclose(out, ref, atol=5e-3, rtol=5e-3)

    # bf16-G path: halves HBM traffic of the dominant G stream (perf option).
    out_bf16 = jax.block_until_ready(
        hgnn_conv(x, weight, bias, G, tm=256, tk=256,
                  compute_dtype=jnp.bfloat16))
    assert out_bf16.shape == (N, out_ft)
    assert jnp.allclose(out_bf16, ref, atol=0.5, rtol=5e-2)

    print("KERNEL_OK")
</pallas_src>

<mosaic_0001>
module attributes {stable_mosaic.version = 11 : i64} {
  func.func @_xw_bias_kernel(%arg0: i32, %arg1: memref<256x64xf32, #tpu.memory_space<vmem>>, %arg2: memref<64x128xf32, #tpu.memory_space<vmem>>, %arg3: memref<1x128xf32, #tpu.memory_space<vmem>>, %arg4: memref<256x128xf32, #tpu.memory_space<vmem>>) attributes {dimension_semantics = [#tpu.dimension_semantics<parallel>], iteration_bounds = array<i64: 2>, scalar_prefetch = 0 : i64, scratch_operands = 0 : i64, tpu.core_type = #tpu.core_type<tc>, window_params = [{transform_indices = @transform_0, window_bounds = array<i64: 256, 64>}, {pipeline_mode = #tpu.pipeline_mode<synchronous>, transform_indices = @transform_1, window_bounds = array<i64: 64, 128>}, {pipeline_mode = #tpu.pipeline_mode<synchronous>, transform_indices = @transform_2, window_bounds = array<i64: 1, 128>}, {transform_indices = @transform_3, window_bounds = array<i64: 256, 128>}]} {
    %c0 = arith.constant 0 : index
    %c0_0 = arith.constant 0 : index
    %0 = vector.load %arg1[%c0, %c0_0] : memref<256x64xf32, #tpu.memory_space<vmem>>, vector<256x64xf32>
    %c0_1 = arith.constant 0 : index
    %c0_2 = arith.constant 0 : index
    %1 = vector.load %arg2[%c0_1, %c0_2] : memref<64x128xf32, #tpu.memory_space<vmem>>, vector<64x128xf32>
    %cst = arith.constant dense<0.000000e+00> : vector<256x128xf32>
    %2 = tpu.matmul %0, %1, %cst {dimension_numbers = #tpu.dot_dimension_numbers<[1], [0], [0], [1], [0, 0, 1, 1], [], []>} : vector<256x64xf32>, vector<64x128xf32>, vector<256x128xf32> -> vector<256x128xf32>
    %c0_3 = arith.constant 0 : index
    %c0_4 = arith.constant 0 : index
    %3 = vector.load %arg3[%c0_3, %c0_4] : memref<1x128xf32, #tpu.memory_space<vmem>>, vector<1x128xf32>
    %4 = vector.broadcast %3 : vector<1x128xf32> to vector<256x128xf32>
    %5 = arith.addf %2, %4 : vector<256x128xf32>
    %c0_5 = arith.constant 0 : index
    %c0_6 = arith.constant 0 : index
    %6 = vector.load %arg4[%c0_5, %c0_6] : memref<256x128xf32, #tpu.memory_space<vmem>>, vector<256x128xf32>
    tpu.vector_store %arg4[%c0_5, %c0_6], %5 {strides = array<i32>} : memref<256x128xf32, #tpu.memory_space<vmem>>, vector<256x128xf32>,
    return
  }
  func.func @transform_0(%arg0: i32) -> (i32, i32) {
    %c0_i32 = arith.constant 0 : i32
    %c0_i32_0 = arith.constant 0 : i32
    return %arg0, %c0_i32 : i32, i32
  }
  func.func @transform_1(%arg0: i32) -> (i32, i32) {
    %c0_i32 = arith.constant 0 : i32
    %c0_i32_0 = arith.constant 0 : i32
    %c0_i32_1 = arith.constant 0 : i32
    return %c0_i32, %c0_i32_0 : i32, i32
  }
  func.func @transform_2(%arg0: i32) -> (i32, i32) {
    %c0_i32 = arith.constant 0 : i32
    %c0_i32_0 = arith.constant 0 : i32
    %c0_i32_1 = arith.constant 0 : i32
    return %c0_i32, %c0_i32_0 : i32, i32
  }
  func.func @transform_3(%arg0: i32) -> (i32, i32) {
    %c0_i32 = arith.constant 0 : i32
    %c0_i32_0 = arith.constant 0 : i32
    return %arg0, %c0_i32 : i32, i32
  }
}

</mosaic_0001>

<llo_original>
// kernel: tpu_custom_call.1
$region0: #{tpu_custom_call.1}
  #allocation0 [shape = 'u32[]', space=smem, size = 0x4, offset = 0x4, fixed_abs, tag = 'smem constant byte address 0x4 - core index']
  #allocation1 [shape = 'u32[144,128]{1,0:T(1,128)}', space=vmem, size = 0x12000, scoped, tag = 'internal scratch']
  %s0 = inlined_call_operand.vmem [shape: f32[512,64], index: 0, kind: input, shape index: {}]
  %s1 = inlined_call_operand.vmem [shape: f32[64,128], index: 1, kind: input, shape index: {}]
  %s2 = inlined_call_operand.vmem [shape: f32[1,128], index: 2, kind: input, shape index: {}]
  %s3 = inlined_call_operand.hbm [shape: f32[512,128], index: 3, kind: output, shape index: {}]
  %s4 = sld [smem:[#allocation0]]
  $region45: #{tpu_custom_call.1} parent=0
    _
  %s6 = ssub.s32 1, %s4
  %s7 = scalar_select 0, %s6, %s4
  $region1: #{tpu_custom_call.1} parent=0
    #allocation2 [shape = 'u8[262144]{0}', space=vmem, size = 0x40000, scoped, tag = 'output window, operand 0']
    #allocation3 [shape = 's32[2]{0}', space=sflag, size = 0x8, scoped, tag = 'scoped memory for tpu_custom_call.1']
    %8 = vsyncpa [#allocation3], 0
    %s9 = scalar_lea.sflag [#allocation3], 1
    %10 = vsyncpa %s9, 0
    loop: start=0, step=1, limit=4
    $region2: #{tpu_custom_call.1} parent=1 // loop_pre_header
      _
    $region3: #{tpu_custom_call.1} parent=1 // loop_header
      %s12 = sphi 0, %s16
      %p13 = scmp.ge.s32.totalorder %s12, 4
      %s22 = sphi 0, %s24
      %s25 = sphi 0, %s22
      %s26 = sphi 0, %s25
      %s42 = sphi 0, %s26
      %s46 = sphi 0, %s46
      %s48 = sphi 0, %s46
      %s49 = sphi 0, %s48
      %s63 = sphi 0, %s49
      %s67 = sphi 0, %s67
      %s69 = sphi 0, %s67
      %s70 = sphi 0, %s69
      %s84 = sphi 0, %s70
      %s90 = sphi 0, %s92
      %s93 = sphi 0, %s90
      %s94 = sphi 0, %s93
      %s110 = sphi 0, %s94
    $region4: #{tpu_custom_call.1} parent=1 // loop_header_branch
      %15 = sbr.rel (%p13) target = $region8
    $region5: #{tpu_custom_call.1} parent=1 // loop_body
      %s17 = ssub.s32 %s12, 1
      %s18 = ssub.s32 %s12, 2
      %s19 = sadd.s32 %s12, 1
      %s20 = ssub.s32 %s12, %s19
      %p21 = scmp.eq.s32.totalorder %s20, 0
      %s23 = sadd.s32 %s22, 1
      %s24 = scalar_select %p21, %s22, %s23
      %p27 = pneg %p21
      %p28 = scmp.eq.s32.totalorder %s12, 1
      %p29 = por %p27, %p28
      %p30 = scmp.ne.s32.totalorder %s22, %s25
      %p31 = scmp.eq.s32.totalorder %s12, 0
      %p32 = por %p30, %p31
      %p33 = scmp.ne.s32.totalorder %s22, %s25
      %p34 = scmp.eq.s32.totalorder %s17, 1
      %p35 = por %p33, %p34
      %p36 = scmp.ne.s32.totalorder %s25, %s26
      %p37 = scmp.eq.s32.totalorder %s17, 0
      %p38 = por %p36, %p37
      %p39 = scmp.ne.s32.totalorder %s25, %s26
      %p40 = scmp.eq.s32.totalorder %s18, 1
      %p41 = por %p39, %p40
      %p43 = scmp.ne.s32.totalorder %s26, %s42
      %p44 = scmp.eq.s32.totalorder %s18, 0
      %p45 = por %p43, %p44
      %s47 = sadd.s32 %s46, 1
      %p50 = scmp.eq.s32.totalorder %s12, 1
      %p51 = scmp.ne.s32.totalorder %s46, %s48
      %p52 = scmp.eq.s32.totalorder %s12, 0
      %p53 = por %p51, %p52
      %p54 = scmp.ne.s32.totalorder %s46, %s48
      %p55 = scmp.eq.s32.totalorder %s17, 1
      %p56 = por %p54, %p55
      %p57 = scmp.ne.s32.totalorder %s48, %s49
      %p58 = scmp.eq.s32.totalorder %s17, 0
      %p59 = por %p57, %p58
      %p60 = scmp.ne.s32.totalorder %s48, %s49
      %p61 = scmp.eq.s32.totalorder %s18, 1
      %p62 = por %p60, %p61
      %p64 = scmp.ne.s32.totalorder %s49, %s63
      %p65 = scmp.eq.s32.totalorder %s18, 0
      %p66 = por %p64, %p65
      %s68 = sadd.s32 %s67, 1
      %p71 = scmp.eq.s32.totalorder %s12, 1
      %p72 = scmp.ne.s32.totalorder %s67, %s69
      %p73 = scmp.eq.s32.totalorder %s12, 0
      %p74 = por %p72, %p73
      %p75 = scmp.ne.s32.totalorder %s67, %s69
      %p76 = scmp.eq.s32.totalorder %s17, 1
      %p77 = por %p75, %p76
      %p78 = scmp.ne.s32.totalorder %s69, %s70
      %p79 = scmp.eq.s32.totalorder %s17, 0
      %p80 = por %p78, %p79
      %p81 = scmp.ne.s32.totalorder %s69, %s70
      %p82 = scmp.eq.s32.totalorder %s18, 1
      %p83 = por %p81, %p82
      %p85 = scmp.ne.s32.totalorder %s70, %s84
      %p86 = scmp.eq.s32.totalorder %s18, 0
      %p87 = por %p85, %p86
      %s88 = ssub.s32 %s12, %s19
      %p89 = scmp.eq.s32.totalorder %s88, 0
      %s91 = sadd.s32 %s90, 1
      %s92 = scalar_select %p89, %s90, %s91
      %p95 = pneg %p89
      %p96 = scmp.eq.s32.totalorder %s12, 1
      %p97 = por %p95, %p96
      %p98 = scmp.ne.s32.totalorder %s90, %s93
      %p99 = scmp.eq.s32.totalorder %s12, 0
      %p100 = por %p98, %p99
      %p101 = scmp.ne.s32.totalorder %s90, %s93
      %p102 = scmp.eq.s32.totalorder %s17, 1
      %p103 = por %p101, %p102
      %p104 = scmp.ne.s32.totalorder %s93, %s94
      %p105 = scmp.eq.s32.totalorder %s17, 0
      %p106 = por %p104, %p105
      %p107 = scmp.ne.s32.totalorder %s93, %s94
      %p108 = scmp.eq.s32.totalorder %s18, 1
      %p109 = por %p107, %p108
      %p111 = scmp.ne.s32.totalorder %s94, %s110
      %p112 = scmp.eq.s32.totalorder %s18, 0
      %p113 = por %p111, %p112
      %p114 = scmp.le.s32.totalorder 1, %s12
      %p115 = scmp.lt.s32.totalorder %s12, 3
      %p116 = pnand %p114, %p115
      %p117 = pneg %p116
      // Predicated region
      $region9: #{tpu_custom_call.1} parent=5 // pred_check
        _
      $region10: #{tpu_custom_call.1} parent=5 // pred_check_branch
        %119 = sbr.rel (%p116) target = $region12
      $region11: #{tpu_custom_call.1} parent=5 // pred_region
        %s120 = ssub.s32 %s12, 1
        // Predicated region
        $region13: #{tpu_custom_call.1} parent=11 // pred_check
          %p121 = pneg %p59
        $region14: #{tpu_custom_call.1} parent=11 // pred_check_branch
          %123 = sbr.rel (%p121) target = $region16
        $region15: #{tpu_custom_call.1} parent=11 // pred_region
          _
        $region16: #{tpu_custom_call.1} parent=11 // pred_fallthru
          _
        // Predicated region
        $region17: #{tpu_custom_call.1} parent=11 // pred_check
          %p124 = pneg %p80
        $region18: #{tpu_custom_call.1} parent=11 // pred_check_branch
          %126 = sbr.rel (%p124) target = $region20
        $region19: #{tpu_custom_call.1} parent=11 // pred_region
          _
        $region20: #{tpu_custom_call.1} parent=11 // pred_fallthru
          _
      $region12: #{tpu_custom_call.1} parent=5 // pred_fallthru
        _
      %p127 = scmp.lt.s32.totalorder %s12, 2
      // Predicated region
      $region21: #{tpu_custom_call.1} parent=5 // pred_check
        %p128 = pneg %p127
      $region22: #{tpu_custom_call.1} parent=5 // pred_check_branch
        %130 = sbr.rel (%p128) target = $region24
      $region23: #{tpu_custom_call.1} parent=5 // pred_region
        // Predicated region
        $region25: #{tpu_custom_call.1} parent=23 // pred_check
          %p131 = pneg %p32
        $region26: #{tpu_custom_call.1} parent=23 // pred_check_branch
          %133 = sbr.rel (%p131) target = $region28
        $region27: #{tpu_custom_call.1} parent=23 // pred_region
          %s134 = smul.u32 32, %s12
          %p135 = scmp.lt.s32.totalorder %s134, 63
          %s136 = scalar_select %p135, %s134, 63
          %s137 = smul.addr %s136, 8
          %s138 = scalar_lea.vmem %s0, %s137
          %s139 = smul.u32 32, %s12
        $region28: #{tpu_custom_call.1} parent=23 // pred_fallthru
          _
      $region24: #{tpu_custom_call.1} parent=5 // pred_fallthru
        _
      %p140 = scmp.le.s32.totalorder 1, %s12
      %p141 = scmp.lt.s32.totalorder %s12, 3
      %p142 = pnand %p140, %p141
      %p143 = pneg %p142
      // Predicated region
      $region29: #{tpu_custom_call.1} parent=5 // pred_check
        _
      $region30: #{tpu_custom_call.1} parent=5 // pred_check_branch
        %145 = sbr.rel (%p142) target = $region32
      $region31: #{tpu_custom_call.1} parent=5 // pred_region
        %s146 = ssub.s32 %s12, 1
        %s147 = smul.u32 32, %s17
        %p148 = scmp.lt.s32.totalorder %s147, 63
        %s149 = scalar_select %p148, %s147, 63
        %s150 = smul.addr %s149, 8
        %s151 = scalar_lea.vmem %s0, %s150
        %p152 = pneg %p38
        %p153 = pneg %p35
        %p154 = pneg %p59
        %p155 = pneg %p56
        %p156 = pneg %p80
        %p157 = pneg %p77
        %p158 = pneg %p106
        %p159 = pneg %p103
        %s160 = sand.u32 %s93, 1
        %s161 = scalar_lea.sflag [#allocation3], %s160
        %s162 = sand.u32 %s93, 1
        %s163 = smul.addr %s162, 256
        %s164 = scalar_lea.vmem [#allocation2], %s163
        %s165 = smul.u32 32, %s17
        %p166 = scmp.lt.s32.totalorder %s165, 63
        %s167 = scalar_select %p166, %s165, 63
        %s168 = smul.addr %s167, 8
        %s169 = scalar_lea.vmem %s0, %s168
        %s170 = smul.u32 32, %s17
        %s171 = smul.u32 32, %s17
        %v172 = vld [vmem:[%s169] sm:$0xff]
        %v173 = vld [vmem:[%s169 + $0x8] sm:$0xff]
        %v174 = vld [vmem:[%s169 + $0x10] sm:$0xff]
        %v175 = vld [vmem:[%s169 + $0x18] sm:$0xff]
        %v176 = vld [vmem:[%s169 + $0x20] sm:$0xff]
        %v177 = vld [vmem:[%s169 + $0x28] sm:$0xff]
        %v178 = vld [vmem:[%s169 + $0x30] sm:$0xff]
        %v179 = vld [vmem:[%s169 + $0x38] sm:$0xff]
        %v180 = vld [vmem:[%s169 + $0x40] sm:$0xff]
        %v181 = vld [vmem:[%s169 + $0x48] sm:$0xff]
        %v182 = vld [vmem:[%s169 + $0x50] sm:$0xff]
        %v183 = vld [vmem:[%s169 + $0x58] sm:$0xff]
        %v184 = vld [vmem:[%s169 + $0x60] sm:$0xff]
        %v185 = vld [vmem:[%s169 + $0x68] sm:$0xff]
        %v186 = vld [vmem:[%s169 + $0x70] sm:$0xff]
        %v187 = vld [vmem:[%s169 + $0x78] sm:$0xff]
        %v188 = vld [vmem:[%s169 + $0x80] sm:$0xff]
        %v189 = vld [vmem:[%s169 + $0x88] sm:$0xff]
        %v190 = vld [vmem:[%s169 + $0x90] sm:$0xff]
        %v191 = vld [vmem:[%s169 + $0x98] sm:$0xff]
        %v192 = vld [vmem:[%s169 + $0xa0] sm:$0xff]
        %v193 = vld [vmem:[%s169 + $0xa8] sm:$0xff]
        %v194 = vld [vmem:[%s169 + $0xb0] sm:$0xff]
        %v195 = vld [vmem:[%s169 + $0xb8] sm:$0xff]
        %v196 = vld [vmem:[%s169 + $0xc0] sm:$0xff]
        %v197 = vld [vmem:[%s169 + $0xc8] sm:$0xff]
        %v198 = vld [vmem:[%s169 + $0xd0] sm:$0xff]
        %v199 = vld [vmem:[%s169 + $0xd8] sm:$0xff]
        %v200 = vld [vmem:[%s169 + $0xe0] sm:$0xff]
        %v201 = vld [vmem:[%s169 + $0xe8] sm:$0xff]
        %v202 = vld [vmem:[%s169 + $0xf0] sm:$0xff]
        %v203 = vld [vmem:[%s169 + $0xf8] sm:$0xff]
        %v204 = vld [vmem:[%s1] sm:$0xff]
        %v205 = vld [vmem:[%s1 + $0x8] sm:$0xff]
        %v206 = vld [vmem:[%s1 + $0x10] sm:$0xff]
        %v207 = vld [vmem:[%s1 + $0x18] sm:$0xff]
        %v208 = vld [vmem:[%s1 + $0x20] sm:$0xff]
        %v209 = vld [vmem:[%s1 + $0x28] sm:$0xff]
        %v210 = vld [vmem:[%s1 + $0x30] sm:$0xff]
        %v211 = vld [vmem:[%s1 + $0x38] sm:$0xff]
        %v212 = vld [vmem:[%s2] sm:$0x1]
        %v214 = vlaneseq
        %v215 = vshrl.u32 %v214, 7
        %v216 = vsub.s32 0, %v215
        %v217 = vrot.slane %v212, %v216
        %vm219 = vcmask 523264
        %v221 = vsel %vm219, %v172, 0
        %v224 = vsel %vm219, %v173, 0
        %v227 = vsel %vm219, %v174, 0
        %v230 = vsel %vm219, %v175, 0
        %v233 = vsel %vm219, %v176, 0
        %v236 = vsel %vm219, %v177, 0
        %v239 = vsel %vm219, %v178, 0
        %v242 = vsel %vm219, %v179, 0
        %v245 = vsel %vm219, %v180, 0
        %v248 = vsel %vm219, %v181, 0
        %v251 = vsel %vm219, %v182, 0
        %v254 = vsel %vm219, %v183, 0
        %v257 = vsel %vm219, %v184, 0
        %v260 = vsel %vm219, %v185, 0
        %v263 = vsel %vm219, %v186, 0
        %v266 = vsel %vm219, %v187, 0
        %v269 = vsel %vm219, %v188, 0
        %v272 = vsel %vm219, %v189, 0
        %v275 = vsel %vm219, %v190, 0
        %v278 = vsel %vm219, %v191, 0
        %v281 = vsel %vm219, %v192, 0
        %v284 = vsel %vm219, %v193, 0
        %v287 = vsel %vm219, %v194, 0
        %v290 = vsel %vm219, %v195, 0
        %v293 = vsel %vm219, %v196, 0
        %v296 = vsel %vm219, %v197, 0
        %v299 = vsel %vm219, %v198, 0
        %v302 = vsel %vm219, %v199, 0
        %v305 = vsel %vm219, %v200, 0
        %v308 = vsel %vm219, %v201, 0
        %v311 = vsel %vm219, %v202, 0
        %v314 = vsel %vm219, %v203, 0
        %316 = vmatprep.subr.mxu0 0.0
        %317 = vmatpush1.msra.mxu0 0.0
        %318 = vmatprep.subr.mxu0 0.0
        %319 = vmatpush1.msra.mxu0 0.0
        %320 = vmatprep.subr.mxu0 0.0
        %321 = vmatpush1.msra.mxu0 0.0
        %322 = vmatprep.subr.mxu0 0.0
        %323 = vmatpush1.msra.mxu0 0.0
        %324 = vmatprep.subr.mxu0 0.0
        %325 = vmatpush1.msra.mxu0 0.0
        %326 = vmatprep.subr.mxu0 0.0
        %327 = vmatpush1.msra.mxu0 0.0
        %328 = vmatprep.subr.mxu0 0.0
        %329 = vmatpush1.msra.mxu0 0.0
        %330 = vmatprep.subr.mxu0 0.0
        %331 = vmatpush1.msra.mxu0 0.0
        %332 = vmatprep.subr.mxu0 0.0
        %333 = vmatpush1.msra.mxu0 %v211
        %334 = vmatprep.subr.mxu0 0.0
        %335 = vmatpush1.msra.mxu0 %v210
        %336 = vmatprep.subr.mxu0 0.0
        %337 = vmatpush1.msra.mxu0 %v209
        %338 = vmatprep.subr.mxu0 0.0
        %339 = vmatpush1.msra.mxu0 %v208
        %340 = vmatprep.subr.mxu0 0.0
        %341 = vmatpush1.msra.mxu0 %v207
        %342 = vmatprep.subr.mxu0 0.0
        %343 = vmatpush1.msra.mxu0 %v206
        %344 = vmatprep.subr.mxu0 0.0
        %345 = vmatpush1.msra.mxu0 %v205
        %346 = vmatprep.subr.mxu0 0.0
        %347 = vmatpush1.msra.mxu0 %v204
        %348 = vmatprep.subr.mxu0 0.0
        %349 = vmatpush2.msra.mxu0 0.0
        %350 = vmatprep.subr.mxu0 0.0
        %351 = vmatpush2.msra.mxu0 0.0
        %352 = vmatprep.subr.mxu0 0.0
        %353 = vmatpush2.msra.mxu0 0.0
        %354 = vmatprep.subr.mxu0 0.0
        %355 = vmatpush2.msra.mxu0 0.0
        %356 = vmatprep.subr.mxu0 0.0
        %357 = vmatpush2.msra.mxu0 0.0
        %358 = vmatprep.subr.mxu0 0.0
        %359 = vmatpush2.msra.mxu0 0.0
        %360 = vmatprep.subr.mxu0 0.0
        %361 = vmatpush2.msra.mxu0 0.0
        %362 = vmatprep.subr.mxu0 0.0
        %363 = vmatpush2.msra.mxu0 0.0
        %364 = vmatprep.subr.mxu0 0.0
        %365 = vmatpush2.msra.mxu0 0.0
        %366 = vmatprep.subr.mxu0 0.0
        %367 = vmatpush2.msra.mxu0 0.0
        %368 = vmatprep.subr.mxu0 0.0
        %369 = vmatpush2.msra.mxu0 0.0
        %370 = vmatprep.subr.mxu0 0.0
        %371 = vmatpush2.msra.mxu0 0.0
        %372 = vmatprep.subr.mxu0 0.0
        %373 = vmatpush2.msra.mxu0 0.0
        %374 = vmatprep.subr.mxu0 0.0
        %375 = vmatpush2.msra.mxu0 0.0
        %376 = vmatprep.subr.mxu0 0.0
        %377 = vmatpush2.msra.mxu0 0.0
        %378 = vmatprep.subr.mxu0 0.0
        %379 = vmatpush2.msra.mxu0 0.0
        %380 = vmatprep.mubr.f32.mxu0 0.0
        %381 = vmatmul.mubr.f32.gmra.mxu0 %v221
        %v382 = vpop.f32.mrf.mxu0
        %v383 = vadd.f32 %v217, %v382
        %v384 = vpop.f32.mrf.mxu0
        %385 = vmatprep.mubr.f32.mxu0 0.0
        %386 = vmatmul.mubr.f32.gmra.mxu0 %v224
        %v387 = vpop.f32.mrf.mxu0
        %v388 = vadd.f32 %v217, %v387
        %v389 = vpop.f32.mrf.mxu0
        %390 = vmatprep.mubr.f32.mxu0 0.0
        %391 = vmatmul.mubr.f32.gmra.mxu0 %v227
        %v392 = vpop.f32.mrf.mxu0
        %v393 = vadd.f32 %v217, %v392
        %v394 = vpop.f32.mrf.mxu0
        %395 = vmatprep.mubr.f32.mxu0 0.0
        %396 = vmatmul.mubr.f32.gmra.mxu0 %v230
        %v397 = vpop.f32.mrf.mxu0
        %v398 = vadd.f32 %v217, %v397
        %v399 = vpop.f32.mrf.mxu0
        %400 = vmatprep.mubr.f32.mxu0 0.0
        %401 = vmatmul.mubr.f32.gmra.mxu0 %v233
        %v402 = vpop.f32.mrf.mxu0
        %v403 = vadd.f32 %v217, %v402
        %v404 = vpop.f32.mrf.mxu0
        %405 = vmatprep.mubr.f32.mxu0 0.0
        %406 = vmatmul.mubr.f32.gmra.mxu0 %v236
        %v407 = vpop.f32.mrf.mxu0
        %v408 = vadd.f32 %v217, %v407
        %v409 = vpop.f32.mrf.mxu0
        %410 = vmatprep.mubr.f32.mxu0 0.0
        %411 = vmatmul.mubr.f32.gmra.mxu0 %v239
        %v412 = vpop.f32.mrf.mxu0
        %v413 = vadd.f32 %v217, %v412
        %v414 = vpop.f32.mrf.mxu0
        %415 = vmatprep.mubr.f32.mxu0 0.0
        %416 = vmatmul.mubr.f32.gmra.mxu0 %v242
        %v417 = vpop.f32.mrf.mxu0
        %v418 = vadd.f32 %v217, %v417
        %v419 = vpop.f32.mrf.mxu0
        %420 = vmatprep.mubr.f32.mxu0 0.0
        %421 = vmatmul.mubr.f32.gmra.mxu0 %v245
        %v422 = vpop.f32.mrf.mxu0
        %v423 = vadd.f32 %v217, %v422
        %v424 = vpop.f32.mrf.mxu0
        %425 = vmatprep.mubr.f32.mxu0 0.0
        %426 = vmatmul.mubr.f32.gmra.mxu0 %v248
        %v427 = vpop.f32.mrf.mxu0
        %v428 = vadd.f32 %v217, %v427
        %v429 = vpop.f32.mrf.mxu0
        %430 = vmatprep.mubr.f32.mxu0 0.0
        %431 = vmatmul.mubr.f32.gmra.mxu0 %v251
        %v432 = vpop.f32.mrf.mxu0
        %v433 = vadd.f32 %v217, %v432
        %v434 = vpop.f32.mrf.mxu0
        %435 = vmatprep.mubr.f32.mxu0 0.0
        %436 = vmatmul.mubr.f32.gmra.mxu0 %v254
        %v437 = vpop.f32.mrf.mxu0
        %v438 = vadd.f32 %v217, %v437
        %v439 = vpop.f32.mrf.mxu0
        %440 = vmatprep.mubr.f32.mxu0 0.0
        %441 = vmatmul.mubr.f32.gmra.mxu0 %v257
        %v442 = vpop.f32.mrf.mxu0
        %v443 = vadd.f32 %v217, %v442
        %v444 = vpop.f32.mrf.mxu0
        %445 = vmatprep.mubr.f32.mxu0 0.0
        %446 = vmatmul.mubr.f32.gmra.mxu0 %v260
        %v447 = vpop.f32.mrf.mxu0
        %v448 = vadd.f32 %v217, %v447
        %v449 = vpop.f32.mrf.mxu0
        %450 = vmatprep.mubr.f32.mxu0 0.0
        %451 = vmatmul.mubr.f32.gmra.mxu0 %v263
        %v452 = vpop.f32.mrf.mxu0
        %v453 = vadd.f32 %v217, %v452
        %v454 = vpop.f32.mrf.mxu0
        %455 = vmatprep.mubr.f32.mxu0 0.0
        %456 = vmatmul.mubr.f32.gmra.mxu0 %v266
        %v457 = vpop.f32.mrf.mxu0
        %v458 = vadd.f32 %v217, %v457
        %v459 = vpop.f32.mrf.mxu0
        %460 = vmatprep.mubr.f32.mxu0 0.0
        %461 = vmatmul.mubr.f32.gmra.mxu0 %v269
        %v462 = vpop.f32.mrf.mxu0
        %v463 = vadd.f32 %v217, %v462
        %v464 = vpop.f32.mrf.mxu0
        %465 = vmatprep.mubr.f32.mxu0 0.0
        %466 = vmatmul.mubr.f32.gmra.mxu0 %v272
        %v467 = vpop.f32.mrf.mxu0
        %v468 = vadd.f32 %v217, %v467
        %v469 = vpop.f32.mrf.mxu0
        %470 = vmatprep.mubr.f32.mxu0 0.0
        %471 = vmatmul.mubr.f32.gmra.mxu0 %v275
        %v472 = vpop.f32.mrf.mxu0
        %v473 = vadd.f32 %v217, %v472
        %v474 = vpop.f32.mrf.mxu0
        %475 = vmatprep.mubr.f32.mxu0 0.0
        %476 = vmatmul.mubr.f32.gmra.mxu0 %v278
        %v477 = vpop.f32.mrf.mxu0
        %v478 = vadd.f32 %v217, %v477
        %v479 = vpop.f32.mrf.mxu0
        %480 = vmatprep.mubr.f32.mxu0 0.0
        %481 = vmatmul.mubr.f32.gmra.mxu0 %v281
        %v482 = vpop.f32.mrf.mxu0
        %v483 = vadd.f32 %v217, %v482
        %v484 = vpop.f32.mrf.mxu0
        %485 = vmatprep.mubr.f32.mxu0 0.0
        %486 = vmatmul.mubr.f32.gmra.mxu0 %v284
        %v487 = vpop.f32.mrf.mxu0
        %v488 = vadd.f32 %v217, %v487
        %v489 = vpop.f32.mrf.mxu0
        %490 = vmatprep.mubr.f32.mxu0 0.0
        %491 = vmatmul.mubr.f32.gmra.mxu0 %v287
        %v492 = vpop.f32.mrf.mxu0
        %v493 = vadd.f32 %v217, %v492
        %v494 = vpop.f32.mrf.mxu0
        %495 = vmatprep.mubr.f32.mxu0 0.0
        %496 = vmatmul.mubr.f32.gmra.mxu0 %v290
        %v497 = vpop.f32.mrf.mxu0
        %v498 = vadd.f32 %v217, %v497
        %v499 = vpop.f32.mrf.mxu0
        %500 = vmatprep.mubr.f32.mxu0 0.0
        %501 = vmatmul.mubr.f32.gmra.mxu0 %v293
        %v502 = vpop.f32.mrf.mxu0
        %v503 = vadd.f32 %v217, %v502
        %v504 = vpop.f32.mrf.mxu0
        %505 = vmatprep.mubr.f32.mxu0 0.0
        %506 = vmatmul.mubr.f32.gmra.mxu0 %v296
        %v507 = vpop.f32.mrf.mxu0
        %v508 = vadd.f32 %v217, %v507
        %v509 = vpop.f32.mrf.mxu0
        %510 = vmatprep.mubr.f32.mxu0 0.0
        %511 = vmatmul.mubr.f32.gmra.mxu0 %v299
        %v512 = vpop.f32.mrf.mxu0
        %v513 = vadd.f32 %v217, %v512
        %v514 = vpop.f32.mrf.mxu0
        %515 = vmatprep.mubr.f32.mxu0 0.0
        %516 = vmatmul.mubr.f32.gmra.mxu0 %v302
        %v517 = vpop.f32.mrf.mxu0
        %v518 = vadd.f32 %v217, %v517
        %v519 = vpop.f32.mrf.mxu0
        %520 = vmatprep.mubr.f32.mxu0 0.0
        %521 = vmatmul.mubr.f32.gmra.mxu0 %v305
        %v522 = vpop.f32.mrf.mxu0
        %v523 = vadd.f32 %v217, %v522
        %v524 = vpop.f32.mrf.mxu0
        %525 = vmatprep.mubr.f32.mxu0 0.0
        %526 = vmatmul.mubr.f32.gmra.mxu0 %v308
        %v527 = vpop.f32.mrf.mxu0
        %v528 = vadd.f32 %v217, %v527
        %v529 = vpop.f32.mrf.mxu0
        %530 = vmatprep.mubr.f32.mxu0 0.0
        %531 = vmatmul.mubr.f32.gmra.mxu0 %v311
        %v532 = vpop.f32.mrf.mxu0
        %v533 = vadd.f32 %v217, %v532
        %v534 = vpop.f32.mrf.mxu0
        %535 = vmatprep.mubr.f32.mxu0 0.0
        %536 = vmatmul.mubr.f32.gmra.mxu0 %v314
        %v537 = vpop.f32.mrf.mxu0
        %v538 = vadd.f32 %v217, %v537
        %v539 = vpop.f32.mrf.mxu0
        %540 = vdwg.mxu0
        %541 = vst [vmem:[%s164] sm:$0xff] %v383
        %542 = vst [vmem:[%s164 + $0x8] sm:$0xff] %v388
        %543 = vst [vmem:[%s164 + $0x10] sm:$0xff] %v393
        %544 = vst [vmem:[%s164 + $0x18] sm:$0xff] %v398
        %545 = vst [vmem:[%s164 + $0x20] sm:$0xff] %v403
        %546 = vst [vmem:[%s164 + $0x28] sm:$0xff] %v408
        %547 = vst [vmem:[%s164 + $0x30] sm:$0xff] %v413
        %548 = vst [vmem:[%s164 + $0x38] sm:$0xff] %v418
        %549 = vst [vmem:[%s164 + $0x40] sm:$0xff] %v423
        %550 = vst [vmem:[%s164 + $0x48] sm:$0xff] %v428
        %551 = vst [vmem:[%s164 + $0x50] sm:$0xff] %v433
        %552 = vst [vmem:[%s164 + $0x58] sm:$0xff] %v438
        %553 = vst [vmem:[%s164 + $0x60] sm:$0xff] %v443
        %554 = vst [vmem:[%s164 + $0x68] sm:$0xff] %v448
        %555 = vst [vmem:[%s164 + $0x70] sm:$0xff] %v453
        %556 = vst [vmem:[%s164 + $0x78] sm:$0xff] %v458
        %557 = vst [vmem:[%s164 + $0x80] sm:$0xff] %v463
        %558 = vst [vmem:[%s164 + $0x88] sm:$0xff] %v468
        %559 = vst [vmem:[%s164 + $0x90] sm:$0xff] %v473
        %560 = vst [vmem:[%s164 + $0x98] sm:$0xff] %v478
        %561 = vst [vmem:[%s164 + $0xa0] sm:$0xff] %v483
        %562 = vst [vmem:[%s164 + $0xa8] sm:$0xff] %v488
        %563 = vst [vmem:[%s164 + $0xb0] sm:$0xff] %v493
        %564 = vst [vmem:[%s164 + $0xb8] sm:$0xff] %v498
        %565 = vst [vmem:[%s164 + $0xc0] sm:$0xff] %v503
        %566 = vst [vmem:[%s164 + $0xc8] sm:$0xff] %v508
        %567 = vst [vmem:[%s164 + $0xd0] sm:$0xff] %v513
        %568 = vst [vmem:[%s164 + $0xd8] sm:$0xff] %v518
        %569 = vst [vmem:[%s164 + $0xe0] sm:$0xff] %v523
        %570 = vst [vmem:[%s164 + $0xe8] sm:$0xff] %v528
        %571 = vst [vmem:[%s164 + $0xf0] sm:$0xff] %v533
        %572 = vst [vmem:[%s164 + $0xf8] sm:$0xff] %v538
        %s573 = sand.u32 %s93, 1
        %s574 = scalar_lea.sflag [#allocation3], %s573
        %s575 = sand.u32 %s93, 1
        %s576 = smul.addr %s575, 256
        %s577 = scalar_lea.vmem [#allocation2], %s576
        // Predicated region
        $region33: #{tpu_custom_call.1} parent=31 // pred_check
          %p578 = pneg %p103
        $region34: #{tpu_custom_call.1} parent=31 // pred_check_branch
          %580 = sbr.rel (%p578) target = $region36
        $region35: #{tpu_custom_call.1} parent=31 // pred_region
          %s581 = smul.u32 32, %s17
          %s583 = ssub.s32 4096, 4096
          %584 = vsyncadd %s574, %s583
          %s585 = smul.addr %s581, 128
          %s586 = scalar_lea.hbm %s3, %s585
          %s587 = sshll.u32 %s577, 4
          %s588 = int_to_ptr.vmem [resolvable:$true] %s587
          %593 = dma.vmem_to_hbm [thread:$0]  %s588, 4096, %s586, %s574, 128, 128, 8
        $region36: #{tpu_custom_call.1} parent=31 // pred_fallthru
          _
      $region32: #{tpu_custom_call.1} parent=5 // pred_fallthru
        _
      %p594 = scmp.le.s32.totalorder 2, %s12
      // Predicated region
      $region37: #{tpu_custom_call.1} parent=5 // pred_check
        %p595 = pneg %p594
      $region38: #{tpu_custom_call.1} parent=5 // pred_check_branch
        %597 = sbr.rel (%p595) target = $region40
      $region39: #{tpu_custom_call.1} parent=5 // pred_region
        %s598 = ssub.s32 %s12, 2
        // Predicated region
        $region41: #{tpu_custom_call.1} parent=39 // pred_check
          %p599 = pneg %p109
        $region42: #{tpu_custom_call.1} parent=39 // pred_check_branch
          %601 = sbr.rel (%p599) target = $region44
        $region43: #{tpu_custom_call.1} parent=39 // pred_region
          %s602 = sand.u32 %s94, 1
          %s603 = scalar_lea.sflag [#allocation3], %s602
          %s604 = sand.u32 %s94, 1
          %s605 = smul.addr %s604, 256
          %s606 = scalar_lea.vmem [#allocation2], %s605
          %607 = dma.done %s603, 4096
        $region44: #{tpu_custom_call.1} parent=39 // pred_fallthru
          _
      $region40: #{tpu_custom_call.1} parent=5 // pred_fallthru
        _
    $region6: #{tpu_custom_call.1} parent=1 // loop_footer
      %s16 = sadd.s32 1, %s12
    $region7: #{tpu_custom_call.1} parent=1 // loop_footer_branch
      %11 = sbr.rel target = $region3
    $region8: #{tpu_custom_call.1} parent=1 // loop_exit
      _
    %608 = vsyncpa [#allocation3], 1
    %s609 = scalar_lea.sflag [#allocation3], 1
    %610 = vsyncpa %s609, 1

</llo_original>
